<compile_context>
chip_gen: v6e
topology: v6e:2x2x1
jax: 0.10.0
libtpu: 0.0.40
codegen_flags: <defaults>
</compile_context>

<pallas_src>
import functools

import jax
import jax.numpy as jnp
from jax.experimental import pallas as pl
from jax.experimental.pallas import tpu as pltpu


def _ceil_to(n, m):
    return -(-n // m) * m


def _sublane(itemsize):
    # Sublane packing of the second-minor dim: 8 (f32), 16 (bf16), 32 (int8).
    return max(8, 32 // int(itemsize))


def _vmem_budget_bytes():
    """~75% of this generation's physical VMEM (v7x: 64 MiB/TC, v5e/v6e: 128 MiB)."""
    cap = None
    try:
        cap = getattr(pltpu.get_tpu_info(), "vmem_capacity_bytes", None)
    except Exception:
        cap = None
    if not cap:
        cap = 64 * 1024 * 1024          # conservative fallback (v7x per-core VMEM)
    return int(cap) * 3 // 4


# ----------------------------------------------------------------------------
# Kernels
# ----------------------------------------------------------------------------
def _conv_full_kernel(x_ref, w_ref, b_ref, o_ref, acc_ref, *,
                      K, dilation, groups, pad, L, compute_dtype):
    """grid=(B,). One whole batch element per step.

    x_ref:   (1, C_in, L)         unpadded input (NCL)
    w_ref:   (G, K, co_g, ci_g)   per-tap weights
    b_ref:   (C_out, 1)           bias (f32)
    o_ref:   (1, C_out, L)        output
    acc_ref: (C_out, L) f32       VMEM accumulator

    Zero padding is implicit: tap k contributes only to output positions
    p in [max(0, pad - k*dil), min(L, L + pad - k*dil)).
    """
    c_in = x_ref.shape[1]
    c_out = o_ref.shape[1]
    ci_g = c_in // groups
    co_g = c_out // groups

    acc_ref[...] = jnp.zeros_like(acc_ref)
    for g in range(groups):
        r0, r1 = g * co_g, (g + 1) * co_g
        c0, c1 = g * ci_g, (g + 1) * ci_g
        for k in range(K):
            lo_o = max(0, pad - k * dilation)
            hi_o = min(L, L + pad - k * dilation)
            if hi_o <= lo_o:
                continue                           # tap falls entirely into padding
            lo_i = lo_o + k * dilation - pad
            hi_i = hi_o + k * dilation - pad
            xs = x_ref[0, c0:c1, lo_i:hi_i].astype(compute_dtype)
            acc_ref[r0:r1, lo_o:hi_o] += jnp.dot(
                w_ref[g, k], xs, preferred_element_type=jnp.float32)
    o_ref[0] = (acc_ref[...] + b_ref[...]).astype(o_ref.dtype)


def _conv_tiled_kernel(xm_ref, xh_ref, w_ref, b_ref, o_ref, *,
                       K, dilation, groups, L_t, compute_dtype):
    """grid=(B, T). One (batch, L-tile); x was zero-padded once in the wrapper.

    xm_ref: (1, C_in, L_t)    main window (non-overlapping tiles of padded x)
    xh_ref: (1, C_in, H_blk)  lane-aligned halo (first H_blk cols of the next tile)
    w_ref:  (G, K, co_g, ci_g); b_ref: (C_out, 1); o_ref: (1, C_out, L_t)
    """
    c_in = xm_ref.shape[1]
    c_out = o_ref.shape[1]
    ci_g = c_in // groups
    co_g = c_out // groups

    window = jnp.concatenate([xm_ref[0], xh_ref[0]], axis=-1)   # (C_in, L_t + H_blk)
    window = window.astype(compute_dtype)
    for g in range(groups):
        r0, r1 = g * co_g, (g + 1) * co_g
        wg = window[g * ci_g:(g + 1) * ci_g, :]
        acc = None
        for k in range(K):
            s = k * dilation
            part = jnp.dot(w_ref[g, k], wg[:, s:s + L_t],
                           preferred_element_type=jnp.float32)
            acc = part if acc is None else acc + part
        o_ref[0, r0:r1, :] = (acc + b_ref[r0:r1, :]).astype(o_ref.dtype)


# ----------------------------------------------------------------------------
# Wrapper
# ----------------------------------------------------------------------------
def same_pad_conv(x, weight, bias, *, kernel_size, dilation=1, groups=1,
                  l_tile=None, compute_dtype=None):
    """SamePadConv.forward.

    x: (B, C_in, L) (PyTorch NCL layout); weight: (C_out, C_in//groups, K);
    bias: (C_out,).  Returns (B, C_out, L) in x.dtype.
    l_tile: force L tiling with roughly this tile size; None = auto.
    compute_dtype: MXU input dtype (default: x.dtype); accumulation is always f32.
    """
    B, C_in, L = x.shape
    C_out = weight.shape[0]
    K = kernel_size
    assert C_in % groups == 0 and C_out % groups == 0
    assert weight.shape == (C_out, C_in // groups, K)

    rf = (K - 1) * dilation + 1
    pad = rf // 2
    halo = rf - 1
    out_dtype = x.dtype
    compute_dtype = jnp.dtype(x.dtype if compute_dtype is None else compute_dtype)
    ci_g = C_in // groups
    co_g = C_out // groups

    # Per-tap weights (G, K, co_g, ci_g); bias as (C_out, 1) f32.
    w = weight.reshape(groups, co_g, ci_g, K)
    w = jnp.transpose(w, (0, 3, 1, 2)).astype(compute_dtype)
    b = bias.reshape(C_out, 1).astype(jnp.float32)

    # ---- per-generation VMEM budget & layout-padded footprints ---------------
    budget = _vmem_budget_bytes()
    isz = jnp.dtype(x.dtype).itemsize
    csz = jnp.dtype(compute_dtype).itemsize
    osz = jnp.dtype(out_dtype).itemsize
    cin_i = _ceil_to(C_in, _sublane(isz))
    cout_o = _ceil_to(C_out, _sublane(osz))
    cout_f = _ceil_to(C_out, 8)
    w_bytes = (2 * groups * K * _ceil_to(co_g, _sublane(csz))
               * _ceil_to(ci_g, 128) * csz)
    lanes_L = _ceil_to(L, 128)
    est_full = (2 * cin_i * lanes_L * isz            # input block, double-buffered
                + 2 * cout_o * lanes_L * osz         # output block, double-buffered
                + cout_f * lanes_L * 4               # f32 accumulator scratch
                + 4 * _ceil_to(co_g, 8) * lanes_L * 4   # matmul temporaries
                + w_bytes + (C_out + 128) * 4 + (1 << 16))

    if l_tile is None and est_full <= budget:
        # ---------------- full-sequence path: grid = (B,) ---------------------
        kernel = functools.partial(
            _conv_full_kernel, K=K, dilation=dilation, groups=groups,
            pad=pad, L=L, compute_dtype=compute_dtype)
        return pl.pallas_call(
            kernel,
            out_shape=jax.ShapeDtypeStruct((B, C_out, L), out_dtype),
            grid=(B,),
            in_specs=[
                pl.BlockSpec((1, C_in, L), lambda bi: (bi, 0, 0)),
                pl.BlockSpec((groups, K, co_g, ci_g), lambda bi: (0, 0, 0, 0)),
                pl.BlockSpec((C_out, 1), lambda bi: (0, 0)),
            ],
            out_specs=pl.BlockSpec((1, C_out, L), lambda bi: (bi, 0, 0)),
            scratch_shapes=[pltpu.VMEM((C_out, L), jnp.float32)],
            compiler_params=pltpu.CompilerParams(
                dimension_semantics=("parallel",),
                vmem_limit_bytes=budget),
        )(x, w, b)

    # -------------------- halo-tiled path: grid = (B, T) ----------------------
    H_blk = max(128, _ceil_to(max(halo, 1), 128))     # lane-aligned halo block
    if l_tile is not None:
        L_t = max(H_blk, _ceil_to(l_tile, H_blk))
    else:
        per_lane = (2 * cin_i * isz + 2 * cout_o * osz
                    + cin_i * csz + 3 * cout_f * 4)
        fixed = (2 * cin_i * H_blk * isz + cin_i * H_blk * csz
                 + w_bytes + (1 << 16))
        free_lanes = max(budget - fixed, 0) // max(per_lane, 1)
        L_t = max(H_blk, (free_lanes // H_blk) * H_blk)
    L_t = min(L_t, _ceil_to(L, H_blk))
    T = -(-L // L_t)
    Lp = T * L_t + H_blk                 # padded length (>= pad + L + (halo - pad))
    x_pad = jnp.pad(x, ((0, 0), (0, 0), (pad, Lp - pad - L)))
    halo_step = L_t // H_blk             # integer: halo block index stride

    kernel = functools.partial(
        _conv_tiled_kernel, K=K, dilation=dilation, groups=groups,
        L_t=L_t, compute_dtype=compute_dtype)
    return pl.pallas_call(
        kernel,
        out_shape=jax.ShapeDtypeStruct((B, C_out, L), out_dtype),
        grid=(B, T),
        in_specs=[
            # main window: non-overlapping L_t tiles of the padded sequence
            pl.BlockSpec((1, C_in, L_t), lambda bi, ti: (bi, 0, ti)),
            # halo: the first H_blk columns of the NEXT tile (small re-read)
            pl.BlockSpec((1, C_in, H_blk),
                         lambda bi, ti: (bi, 0, (ti + 1) * halo_step)),
            # grid-invariant weights / bias (never re-fetched)
            pl.BlockSpec((groups, K, co_g, ci_g), lambda bi, ti: (0, 0, 0, 0)),
            pl.BlockSpec((C_out, 1), lambda bi, ti: (0, 0)),
        ],
        out_specs=pl.BlockSpec((1, C_out, L_t), lambda bi, ti: (bi, 0, ti)),
        compiler_params=pltpu.CompilerParams(
            dimension_semantics=("parallel", "parallel"),
            vmem_limit_bytes=budget),
    )(x_pad, x_pad, w, b)


# ----------------------------------------------------------------------------
# Reference & tests
# ----------------------------------------------------------------------------
def _reference(x, weight, bias, *, kernel_size, dilation=1, groups=1):
    """Pure-JAX reference matching PyTorch SamePadConv.forward."""
    receptive_field = (kernel_size - 1) * dilation + 1
    pad = receptive_field // 2
    out = jax.lax.conv_general_dilated(
        x, weight,
        window_strides=(1,), padding=[(pad, pad)],
        rhs_dilation=(dilation,),
        dimension_numbers=("NCH", "OIH", "NCH"),
        feature_group_count=groups)
    out = out + bias[None, :, None]
    if receptive_field % 2 == 0:
        out = out[:, :, :-1]
    return out


def _init_params(key, in_channels, out_channels, kernel_size, groups):
    """Deterministic Conv1d-shaped parameter init (uniform, Kaiming-like bound)."""
    k_w, k_b = jax.random.split(key)
    fan_in = (in_channels // groups) * kernel_size
    bound = 1.0 / jnp.sqrt(fan_in)
    weight = jax.random.uniform(
        k_w, (out_channels, in_channels // groups, kernel_size),
        minval=-bound, maxval=bound, dtype=jnp.float32)
    bias = jax.random.uniform(
        k_b, (out_channels,), minval=-bound, maxval=bound, dtype=jnp.float32)
    return weight, bias


if __name__ == "__main__":
    key = jax.random.PRNGKey(0)

    def check(B, C_in, C_out, L, ks, dil, grp, key, l_tile=None,
              in_dtype=jnp.float32, atol=1e-4, rtol=1e-4):
        k_x, k_p, key = jax.random.split(key, 3)
        x = jax.random.normal(k_x, (B, C_in, L), dtype=jnp.float32)
        w, b = _init_params(k_p, C_in, C_out, ks, grp)
        x_in = x.astype(in_dtype)
        out = same_pad_conv(x_in, w, b, kernel_size=ks, dilation=dil,
                            groups=grp, l_tile=l_tile)
        out = jax.block_until_ready(out)
        # reference in f32 over the (possibly dtype-rounded) inputs
        x_r = x_in.astype(jnp.float32)
        w_r = w.astype(in_dtype).astype(jnp.float32)
        ref = _reference(x_r, w_r, b, kernel_size=ks, dilation=dil, groups=grp)
        assert out.shape == (B, C_out, L), out.shape
        err = jnp.max(jnp.abs(out.astype(jnp.float32) - ref))
        assert jnp.allclose(out.astype(jnp.float32), ref, atol=atol, rtol=rtol), (
            f"mismatch: ks={ks} dil={dil} grp={grp} L={L} tile={l_tile} "
            f"max_err={err}")
        return key

    # 1: full path, odd receptive field (no trim), groups=1
    key = check(2, 8, 16, 16, ks=3, dil=2, grp=1, key=key)
    # 2: full path, even receptive field (last position trimmed), grouped conv
    key = check(2, 8, 16, 16, ks=4, dil=1, grp=2, key=key)
    # 3: forced halo-tiled path (3 ragged tiles of 128) with dilation
    key = check(2, 16, 32, 320, ks=3, dil=4, grp=1, key=key, l_tile=128)
    # 4: forced halo-tiled path, grouped, even receptive field, ragged L
    key = check(2, 8, 16, 300, ks=4, dil=3, grp=2, key=key, l_tile=128)
    # 5: bf16 end-to-end (halves HBM traffic when upstream is bf16), loose tol
    key = check(2, 16, 32, 256, ks=3, dil=2, grp=1, key=key,
                in_dtype=jnp.bfloat16, atol=2e-2, rtol=2e-2)

    print("KERNEL_OK")
</pallas_src>

<mosaic_0001>
module attributes {stable_mosaic.version = 11 : i64} {
  func.func @_conv_full_kernel(%arg0: i32, %arg1: memref<1x8x16xf32, #tpu.memory_space<vmem>>, %arg2: memref<1x3x16x8xf32, #tpu.memory_space<vmem>>, %arg3: memref<16x1xf32, #tpu.memory_space<vmem>>, %arg4: memref<1x16x16xf32, #tpu.memory_space<vmem>>, %arg5: memref<16x16xf32, #tpu.memory_space<vmem>>) attributes {dimension_semantics = [#tpu.dimension_semantics<parallel>], iteration_bounds = array<i64: 2>, scalar_prefetch = 0 : i64, scratch_operands = 1 : i64, tpu.core_type = #tpu.core_type<tc>, window_params = [{transform_indices = @transform_0, window_bounds = array<i64: 1, 8, 16>}, {pipeline_mode = #tpu.pipeline_mode<synchronous>, transform_indices = @transform_1, window_bounds = array<i64: 1, 3, 16, 8>}, {pipeline_mode = #tpu.pipeline_mode<synchronous>, transform_indices = @transform_2, window_bounds = array<i64: 16, 1>}, {transform_indices = @transform_3, window_bounds = array<i64: 1, 16, 16>}]} {
    %cst = arith.constant 0.000000e+00 : f32
    %0 = vector.broadcast %cst : f32 to vector<16x16xf32>
    %c0 = arith.constant 0 : index
    %c0_0 = arith.constant 0 : index
    %1 = vector.load %arg5[%c0, %c0_0] : memref<16x16xf32, #tpu.memory_space<vmem>>, vector<16x16xf32>
    tpu.vector_store %arg5[%c0, %c0_0], %0 {strides = array<i32>} : memref<16x16xf32, #tpu.memory_space<vmem>>, vector<16x16xf32>,
    %c0_1 = arith.constant 0 : index
    %c0_2 = arith.constant 0 : index
    %c0_3 = arith.constant 0 : index
    %2 = vector.load %arg1[%c0_1, %c0_2, %c0_3] : memref<1x8x16xf32, #tpu.memory_space<vmem>>, vector<1x8x14xf32>
    %3 = vector.shape_cast %2 : vector<1x8x14xf32> to vector<8x14xf32>
    %c0_4 = arith.constant 0 : index
    %c2 = arith.constant 2 : index
    %4 = vector.load %arg5[%c0_4, %c2] : memref<16x16xf32, #tpu.memory_space<vmem>>, vector<16x14xf32>
    %c0_5 = arith.constant 0 : index
    %c0_6 = arith.constant 0 : index
    %c0_7 = arith.constant 0 : index
    %c0_8 = arith.constant 0 : index
    %5 = vector.load %arg2[%c0_5, %c0_6, %c0_7, %c0_8] : memref<1x3x16x8xf32, #tpu.memory_space<vmem>>, vector<1x1x16x8xf32>
    %6 = vector.shape_cast %5 : vector<1x1x16x8xf32> to vector<16x8xf32>
    %cst_9 = arith.constant dense<0.000000e+00> : vector<16x14xf32>
    %7 = tpu.matmul %6, %3, %cst_9 {dimension_numbers = #tpu.dot_dimension_numbers<[1], [0], [0], [1], [0, 0, 1, 1], [], []>} : vector<16x8xf32>, vector<8x14xf32>, vector<16x14xf32> -> vector<16x14xf32>
    %8 = arith.addf %4, %7 : vector<16x14xf32>
    %c0_10 = arith.constant 0 : index
    %c2_11 = arith.constant 2 : index
    %9 = vector.load %arg5[%c0_10, %c2_11] : memref<16x16xf32, #tpu.memory_space<vmem>>, vector<16x14xf32>
    tpu.vector_store %arg5[%c0_10, %c2_11], %8 {strides = array<i32>} : memref<16x16xf32, #tpu.memory_space<vmem>>, vector<16x14xf32>,
    %c0_12 = arith.constant 0 : index
    %c0_13 = arith.constant 0 : index
    %c0_14 = arith.constant 0 : index
    %10 = vector.load %arg1[%c0_12, %c0_13, %c0_14] : memref<1x8x16xf32, #tpu.memory_space<vmem>>, vector<1x8x16xf32>
    %11 = vector.shape_cast %10 : vector<1x8x16xf32> to vector<8x16xf32>
    %c0_15 = arith.constant 0 : index
    %c0_16 = arith.constant 0 : index
    %12 = vector.load %arg5[%c0_15, %c0_16] : memref<16x16xf32, #tpu.memory_space<vmem>>, vector<16x16xf32>
    %c0_17 = arith.constant 0 : index
    %c1 = arith.constant 1 : index
    %c0_18 = arith.constant 0 : index
    %c0_19 = arith.constant 0 : index
    %13 = vector.load %arg2[%c0_17, %c1, %c0_18, %c0_19] : memref<1x3x16x8xf32, #tpu.memory_space<vmem>>, vector<1x1x16x8xf32>
    %14 = vector.shape_cast %13 : vector<1x1x16x8xf32> to vector<16x8xf32>
    %cst_20 = arith.constant dense<0.000000e+00> : vector<16x16xf32>
    %15 = tpu.matmul %14, %11, %cst_20 {dimension_numbers = #tpu.dot_dimension_numbers<[1], [0], [0], [1], [0, 0, 1, 1], [], []>} : vector<16x8xf32>, vector<8x16xf32>, vector<16x16xf32> -> vector<16x16xf32>
    %16 = arith.addf %12, %15 : vector<16x16xf32>
    %c0_21 = arith.constant 0 : index
    %c0_22 = arith.constant 0 : index
    %17 = vector.load %arg5[%c0_21, %c0_22] : memref<16x16xf32, #tpu.memory_space<vmem>>, vector<16x16xf32>
    tpu.vector_store %arg5[%c0_21, %c0_22], %16 {strides = array<i32>} : memref<16x16xf32, #tpu.memory_space<vmem>>, vector<16x16xf32>,
    %c0_23 = arith.constant 0 : index
    %c0_24 = arith.constant 0 : index
    %c2_25 = arith.constant 2 : index
    %18 = vector.load %arg1[%c0_23, %c0_24, %c2_25] : memref<1x8x16xf32, #tpu.memory_space<vmem>>, vector<1x8x14xf32>
    %19 = vector.shape_cast %18 : vector<1x8x14xf32> to vector<8x14xf32>
    %c0_26 = arith.constant 0 : index
    %c0_27 = arith.constant 0 : index
    %20 = vector.load %arg5[%c0_26, %c0_27] : memref<16x16xf32, #tpu.memory_space<vmem>>, vector<16x14xf32>
    %c0_28 = arith.constant 0 : index
    %c2_29 = arith.constant 2 : index
    %c0_30 = arith.constant 0 : index
    %c0_31 = arith.constant 0 : index
    %21 = vector.load %arg2[%c0_28, %c2_29, %c0_30, %c0_31] : memref<1x3x16x8xf32, #tpu.memory_space<vmem>>, vector<1x1x16x8xf32>
    %22 = vector.shape_cast %21 : vector<1x1x16x8xf32> to vector<16x8xf32>
    %cst_32 = arith.constant dense<0.000000e+00> : vector<16x14xf32>
    %23 = tpu.matmul %22, %19, %cst_32 {dimension_numbers = #tpu.dot_dimension_numbers<[1], [0], [0], [1], [0, 0, 1, 1], [], []>} : vector<16x8xf32>, vector<8x14xf32>, vector<16x14xf32> -> vector<16x14xf32>
    %24 = arith.addf %20, %23 : vector<16x14xf32>
    %c0_33 = arith.constant 0 : index
    %c0_34 = arith.constant 0 : index
    %25 = vector.load %arg5[%c0_33, %c0_34] : memref<16x16xf32, #tpu.memory_space<vmem>>, vector<16x14xf32>
    tpu.vector_store %arg5[%c0_33, %c0_34], %24 {strides = array<i32>} : memref<16x16xf32, #tpu.memory_space<vmem>>, vector<16x14xf32>,
    %c0_35 = arith.constant 0 : index
    %c0_36 = arith.constant 0 : index
    %26 = vector.load %arg5[%c0_35, %c0_36] : memref<16x16xf32, #tpu.memory_space<vmem>>, vector<16x16xf32>
    %c0_37 = arith.constant 0 : index
    %c0_38 = arith.constant 0 : index
    %27 = vector.load %arg3[%c0_37, %c0_38] : memref<16x1xf32, #tpu.memory_space<vmem>>, vector<16x1xf32>
    %28 = vector.broadcast %27 : vector<16x1xf32> to vector<16x16xf32>
    %29 = arith.addf %26, %28 : vector<16x16xf32>
    %c0_39 = arith.constant 0 : index
    %c0_40 = arith.constant 0 : index
    %c0_41 = arith.constant 0 : index
    %30 = vector.load %arg4[%c0_39, %c0_40, %c0_41] : memref<1x16x16xf32, #tpu.memory_space<vmem>>, vector<1x16x16xf32>
    %31 = vector.shape_cast %30 : vector<1x16x16xf32> to vector<16x16xf32>
    %32 = vector.shape_cast %29 : vector<16x16xf32> to vector<1x16x16xf32>
    tpu.vector_store %arg4[%c0_39, %c0_40, %c0_41], %32 {strides = array<i32>} : memref<1x16x16xf32, #tpu.memory_space<vmem>>, vector<1x16x16xf32>,
    return
  }
  func.func @transform_0(%arg0: i32) -> (i32, i32, i32) {
    %c0_i32 = arith.constant 0 : i32
    %c0_i32_0 = arith.constant 0 : i32
    %c0_i32_1 = arith.constant 0 : i32
    return %arg0, %c0_i32, %c0_i32_0 : i32, i32, i32
  }
  func.func @transform_1(%arg0: i32) -> (i32, i32, i32, i32) {
    %c0_i32 = arith.constant 0 : i32
    %c0_i32_0 = arith.constant 0 : i32
    %c0_i32_1 = arith.constant 0 : i32
    %c0_i32_2 = arith.constant 0 : i32
    %c0_i32_3 = arith.constant 0 : i32
    return %c0_i32, %c0_i32_0, %c0_i32_1, %c0_i32_2 : i32, i32, i32, i32
  }
  func.func @transform_2(%arg0: i32) -> (i32, i32) {
    %c0_i32 = arith.constant 0 : i32
    %c0_i32_0 = arith.constant 0 : i32
    %c0_i32_1 = arith.constant 0 : i32
    return %c0_i32, %c0_i32_0 : i32, i32
  }
  func.func @transform_3(%arg0: i32) -> (i32, i32, i32) {
    %c0_i32 = arith.constant 0 : i32
    %c0_i32_0 = arith.constant 0 : i32
    %c0_i32_1 = arith.constant 0 : i32
    return %arg0, %c0_i32, %c0_i32_0 : i32, i32, i32
  }
}

</mosaic_0001>

<llo_original>
// kernel: tpu_custom_call.1
$region0: #{tpu_custom_call.1}
  #allocation0 [shape = 'u32[]', space=smem, size = 0x4, offset = 0x4, fixed_abs, tag = 'smem constant byte address 0x4 - core index']
  #allocation1 [shape = 'u32[144,128]{1,0:T(1,128)}', space=vmem, size = 0x12000, scoped, tag = 'internal scratch']
  #allocation2 [shape = 'f32[16,16]{1,0:T(8,128)}', space=vmem, size = 0x2000, scoped, tag = 'scratch operand']
  %s0 = inlined_call_operand.vmem [shape: f32[2,8,16], index: 0, kind: input, shape index: {}]
  %s1 = inlined_call_operand.vmem [shape: f32[1,3,16,8], index: 1, kind: input, shape index: {}]
  %s2 = inlined_call_operand.vmem [shape: f32[16,1], index: 2, kind: input, shape index: {}]
  %s3 = inlined_call_operand.hbm [shape: f32[2,16,16], index: 3, kind: output, shape index: {}]
  %s4 = sld [smem:[#allocation0]]
  $region45: #{tpu_custom_call.1} parent=0
    _
  %s6 = ssub.s32 1, %s4
  %s7 = scalar_select 0, %s6, %s4
  $region1: #{tpu_custom_call.1} parent=0
    #allocation3 [shape = 'u8[16384]{0}', space=vmem, size = 0x4000, scoped, tag = 'output window, operand 0']
    #allocation4 [shape = 's32[2]{0}', space=sflag, size = 0x8, scoped, tag = 'scoped memory for tpu_custom_call.1']
    %8 = vsyncpa [#allocation4], 0
    %s9 = scalar_lea.sflag [#allocation4], 1
    %10 = vsyncpa %s9, 0
    loop: start=0, step=1, limit=4
    $region2: #{tpu_custom_call.1} parent=1 // loop_pre_header
      _
    $region3: #{tpu_custom_call.1} parent=1 // loop_header
      %s12 = sphi 0, %s16
      %p13 = scmp.ge.s32.totalorder %s12, 4
      %s22 = sphi 0, %s24
      %s25 = sphi 0, %s22
      %s26 = sphi 0, %s25
      %s42 = sphi 0, %s26
      %s46 = sphi 0, %s46
      %s48 = sphi 0, %s46
      %s49 = sphi 0, %s48
      %s63 = sphi 0, %s49
      %s67 = sphi 0, %s67
      %s69 = sphi 0, %s67
      %s70 = sphi 0, %s69
      %s84 = sphi 0, %s70
      %s90 = sphi 0, %s92
      %s93 = sphi 0, %s90
      %s94 = sphi 0, %s93
      %s110 = sphi 0, %s94
    $region4: #{tpu_custom_call.1} parent=1 // loop_header_branch
      %15 = sbr.rel (%p13) target = $region8
    $region5: #{tpu_custom_call.1} parent=1 // loop_body
      %s17 = ssub.s32 %s12, 1
      %s18 = ssub.s32 %s12, 2
      %s19 = sadd.s32 %s12, 1
      %s20 = ssub.s32 %s12, %s19
      %p21 = scmp.eq.s32.totalorder %s20, 0
      %s23 = sadd.s32 %s22, 1
      %s24 = scalar_select %p21, %s22, %s23
      %p27 = pneg %p21
      %p28 = scmp.eq.s32.totalorder %s12, 1
      %p29 = por %p27, %p28
      %p30 = scmp.ne.s32.totalorder %s22, %s25
      %p31 = scmp.eq.s32.totalorder %s12, 0
      %p32 = por %p30, %p31
      %p33 = scmp.ne.s32.totalorder %s22, %s25
      %p34 = scmp.eq.s32.totalorder %s17, 1
      %p35 = por %p33, %p34
      %p36 = scmp.ne.s32.totalorder %s25, %s26
      %p37 = scmp.eq.s32.totalorder %s17, 0
      %p38 = por %p36, %p37
      %p39 = scmp.ne.s32.totalorder %s25, %s26
      %p40 = scmp.eq.s32.totalorder %s18, 1
      %p41 = por %p39, %p40
      %p43 = scmp.ne.s32.totalorder %s26, %s42
      %p44 = scmp.eq.s32.totalorder %s18, 0
      %p45 = por %p43, %p44
      %s47 = sadd.s32 %s46, 1
      %p50 = scmp.eq.s32.totalorder %s12, 1
      %p51 = scmp.ne.s32.totalorder %s46, %s48
      %p52 = scmp.eq.s32.totalorder %s12, 0
      %p53 = por %p51, %p52
      %p54 = scmp.ne.s32.totalorder %s46, %s48
      %p55 = scmp.eq.s32.totalorder %s17, 1
      %p56 = por %p54, %p55
      %p57 = scmp.ne.s32.totalorder %s48, %s49
      %p58 = scmp.eq.s32.totalorder %s17, 0
      %p59 = por %p57, %p58
      %p60 = scmp.ne.s32.totalorder %s48, %s49
      %p61 = scmp.eq.s32.totalorder %s18, 1
      %p62 = por %p60, %p61
      %p64 = scmp.ne.s32.totalorder %s49, %s63
      %p65 = scmp.eq.s32.totalorder %s18, 0
      %p66 = por %p64, %p65
      %s68 = sadd.s32 %s67, 1
      %p71 = scmp.eq.s32.totalorder %s12, 1
      %p72 = scmp.ne.s32.totalorder %s67, %s69
      %p73 = scmp.eq.s32.totalorder %s12, 0
      %p74 = por %p72, %p73
      %p75 = scmp.ne.s32.totalorder %s67, %s69
      %p76 = scmp.eq.s32.totalorder %s17, 1
      %p77 = por %p75, %p76
      %p78 = scmp.ne.s32.totalorder %s69, %s70
      %p79 = scmp.eq.s32.totalorder %s17, 0
      %p80 = por %p78, %p79
      %p81 = scmp.ne.s32.totalorder %s69, %s70
      %p82 = scmp.eq.s32.totalorder %s18, 1
      %p83 = por %p81, %p82
      %p85 = scmp.ne.s32.totalorder %s70, %s84
      %p86 = scmp.eq.s32.totalorder %s18, 0
      %p87 = por %p85, %p86
      %s88 = ssub.s32 %s12, %s19
      %p89 = scmp.eq.s32.totalorder %s88, 0
      %s91 = sadd.s32 %s90, 1
      %s92 = scalar_select %p89, %s90, %s91
      %p95 = pneg %p89
      %p96 = scmp.eq.s32.totalorder %s12, 1
      %p97 = por %p95, %p96
      %p98 = scmp.ne.s32.totalorder %s90, %s93
      %p99 = scmp.eq.s32.totalorder %s12, 0
      %p100 = por %p98, %p99
      %p101 = scmp.ne.s32.totalorder %s90, %s93
      %p102 = scmp.eq.s32.totalorder %s17, 1
      %p103 = por %p101, %p102
      %p104 = scmp.ne.s32.totalorder %s93, %s94
      %p105 = scmp.eq.s32.totalorder %s17, 0
      %p106 = por %p104, %p105
      %p107 = scmp.ne.s32.totalorder %s93, %s94
      %p108 = scmp.eq.s32.totalorder %s18, 1
      %p109 = por %p107, %p108
      %p111 = scmp.ne.s32.totalorder %s94, %s110
      %p112 = scmp.eq.s32.totalorder %s18, 0
      %p113 = por %p111, %p112
      %p114 = scmp.le.s32.totalorder 1, %s12
      %p115 = scmp.lt.s32.totalorder %s12, 3
      %p116 = pnand %p114, %p115
      %p117 = pneg %p116
      // Predicated region
      $region9: #{tpu_custom_call.1} parent=5 // pred_check
        _
      $region10: #{tpu_custom_call.1} parent=5 // pred_check_branch
        %119 = sbr.rel (%p116) target = $region12
      $region11: #{tpu_custom_call.1} parent=5 // pred_region
        %s120 = ssub.s32 %s12, 1
        // Predicated region
        $region13: #{tpu_custom_call.1} parent=11 // pred_check
          %p121 = pneg %p59
        $region14: #{tpu_custom_call.1} parent=11 // pred_check_branch
          %123 = sbr.rel (%p121) target = $region16
        $region15: #{tpu_custom_call.1} parent=11 // pred_region
          _
        $region16: #{tpu_custom_call.1} parent=11 // pred_fallthru
          _
        // Predicated region
        $region17: #{tpu_custom_call.1} parent=11 // pred_check
          %p124 = pneg %p80
        $region18: #{tpu_custom_call.1} parent=11 // pred_check_branch
          %126 = sbr.rel (%p124) target = $region20
        $region19: #{tpu_custom_call.1} parent=11 // pred_region
          _
        $region20: #{tpu_custom_call.1} parent=11 // pred_fallthru
          _
      $region12: #{tpu_custom_call.1} parent=5 // pred_fallthru
        _
      %p127 = scmp.lt.s32.totalorder %s12, 2
      // Predicated region
      $region21: #{tpu_custom_call.1} parent=5 // pred_check
        %p128 = pneg %p127
      $region22: #{tpu_custom_call.1} parent=5 // pred_check_branch
        %130 = sbr.rel (%p128) target = $region24
      $region23: #{tpu_custom_call.1} parent=5 // pred_region
        // Predicated region
        $region25: #{tpu_custom_call.1} parent=23 // pred_check
          %p131 = pneg %p32
        $region26: #{tpu_custom_call.1} parent=23 // pred_check_branch
          %133 = sbr.rel (%p131) target = $region28
        $region27: #{tpu_custom_call.1} parent=23 // pred_region
          %p134 = scmp.lt.s32.totalorder %s12, 1
          %s135 = scalar_select %p134, %s12, 1
          %s136 = smul.addr %s135, 8
          %s137 = scalar_lea.vmem %s0, %s136
        $region28: #{tpu_custom_call.1} parent=23 // pred_fallthru
          _
      $region24: #{tpu_custom_call.1} parent=5 // pred_fallthru
        _
      %p138 = scmp.le.s32.totalorder 1, %s12
      %p139 = scmp.lt.s32.totalorder %s12, 3
      %p140 = pnand %p138, %p139
      %p141 = pneg %p140
      // Predicated region
      $region29: #{tpu_custom_call.1} parent=5 // pred_check
        _
      $region30: #{tpu_custom_call.1} parent=5 // pred_check_branch
        %143 = sbr.rel (%p140) target = $region32
      $region31: #{tpu_custom_call.1} parent=5 // pred_region
        %s144 = ssub.s32 %s12, 1
        %p145 = scmp.lt.s32.totalorder %s17, 1
        %s146 = scalar_select %p145, %s17, 1
        %s147 = smul.addr %s146, 8
        %s148 = scalar_lea.vmem %s0, %s147
        %p149 = pneg %p38
        %p150 = pneg %p35
        %p151 = pneg %p59
        %p152 = pneg %p56
        %p153 = pneg %p80
        %p154 = pneg %p77
        %p155 = pneg %p106
        %p156 = pneg %p103
        %s157 = sand.u32 %s93, 1
        %s158 = scalar_lea.sflag [#allocation4], %s157
        %s159 = sand.u32 %s93, 1
        %s160 = smul.addr %s159, 16
        %s161 = scalar_lea.vmem [#allocation3], %s160
        %p162 = scmp.lt.s32.totalorder %s17, 1
        %s163 = scalar_select %p162, %s17, 1
        %s164 = smul.addr %s163, 8
        %s165 = scalar_lea.vmem %s0, %s164
        %vm166 = vcmask 130048
        %167 = vst.msk [vmem:[#allocation2] sm:$0xff] %vm166, 0.0
        %168 = vst.msk [vmem:[#allocation2 + $0x8] sm:$0xff] %vm166, 0.0
        %v169 = vld [vmem:[%s165] sm:$0xff]
        %v170 = vld [vmem:[#allocation2] sm:$0xff]
        %v171 = vld [vmem:[#allocation2 + $0x8] sm:$0xff]
        %v172 = vld [vmem:[%s1] sm:$0xff]
        %v173 = vld [vmem:[%s1 + $0x8] sm:$0xff]
        %vm174 = vcmask 64512
        %v176 = vsel %vm174, %v172, 0
        %v179 = vsel %vm174, %v173, 0
        %181 = vmatprep.subr.mxu0 0.0
        %182 = vmatpush1.msra.mxu0 0.0
        %183 = vmatprep.subr.mxu0 0.0
        %184 = vmatpush1.msra.mxu0 0.0
        %185 = vmatprep.subr.mxu0 0.0
        %186 = vmatpush1.msra.mxu0 0.0
        %187 = vmatprep.subr.mxu0 0.0
        %188 = vmatpush1.msra.mxu0 0.0
        %189 = vmatprep.subr.mxu0 0.0
        %190 = vmatpush1.msra.mxu0 0.0
        %191 = vmatprep.subr.mxu0 0.0
        %192 = vmatpush1.msra.mxu0 0.0
        %193 = vmatprep.subr.mxu0 0.0
        %194 = vmatpush1.msra.mxu0 0.0
        %195 = vmatprep.subr.mxu0 0.0
        %196 = vmatpush1.msra.mxu0 0.0
        %197 = vmatprep.subr.mxu0 0.0
        %198 = vmatpush1.msra.mxu0 0.0
        %199 = vmatprep.subr.mxu0 0.0
        %200 = vmatpush1.msra.mxu0 0.0
        %201 = vmatprep.subr.mxu0 0.0
        %202 = vmatpush1.msra.mxu0 0.0
        %203 = vmatprep.subr.mxu0 0.0
        %204 = vmatpush1.msra.mxu0 0.0
        %205 = vmatprep.subr.mxu0 0.0
        %206 = vmatpush1.msra.mxu0 0.0
        %207 = vmatprep.subr.mxu0 0.0
        %208 = vmatpush1.msra.mxu0 0.0
        %209 = vmatprep.subr.mxu0 0.0
        %210 = vmatpush1.msra.mxu0 0.0
        %211 = vmatprep.subr.mxu0 0.0
        %212 = vmatpush1.msra.mxu0 %v169
        %213 = vmatprep.subr.mxu0 0.0
        %214 = vmatpush2.msra.mxu0 0.0
        %215 = vmatprep.subr.mxu0 0.0
        %216 = vmatpush2.msra.mxu0 0.0
        %217 = vmatprep.subr.mxu0 0.0
        %218 = vmatpush2.msra.mxu0 0.0
        %219 = vmatprep.subr.mxu0 0.0
        %220 = vmatpush2.msra.mxu0 0.0
        %221 = vmatprep.subr.mxu0 0.0
        %222 = vmatpush2.msra.mxu0 0.0
        %223 = vmatprep.subr.mxu0 0.0
        %224 = vmatpush2.msra.mxu0 0.0
        %225 = vmatprep.subr.mxu0 0.0
        %226 = vmatpush2.msra.mxu0 0.0
        %227 = vmatprep.subr.mxu0 0.0
        %228 = vmatpush2.msra.mxu0 0.0
        %229 = vmatprep.subr.mxu0 0.0
        %230 = vmatpush2.msra.mxu0 0.0
        %231 = vmatprep.subr.mxu0 0.0
        %232 = vmatpush2.msra.mxu0 0.0
        %233 = vmatprep.subr.mxu0 0.0
        %234 = vmatpush2.msra.mxu0 0.0
        %235 = vmatprep.subr.mxu0 0.0
        %236 = vmatpush2.msra.mxu0 0.0
        %237 = vmatprep.subr.mxu0 0.0
        %238 = vmatpush2.msra.mxu0 0.0
        %239 = vmatprep.subr.mxu0 0.0
        %240 = vmatpush2.msra.mxu0 0.0
        %241 = vmatprep.subr.mxu0 0.0
        %242 = vmatpush2.msra.mxu0 0.0
        %243 = vmatprep.subr.mxu0 0.0
        %244 = vmatpush2.msra.mxu0 0.0
        %245 = vmatprep.mubr.f32.mxu0 0.0
        %246 = vmatmul.mubr.f32.gmra.mxu0 %v176
        %v247 = vpop.f32.mrf.mxu0
        %v248 = vadd.f32 0.0, %v247
        %v249 = vpop.f32.mrf.mxu0
        %250 = vmatprep.mubr.f32.mxu0 0.0
        %251 = vmatmul.mubr.f32.gmra.mxu0 %v179
        %v252 = vpop.f32.mrf.mxu0
        %v253 = vadd.f32 0.0, %v252
        %v254 = vpop.f32.mrf.mxu0
        %255 = vdwg.mxu0
        %258 = vrot.lane.b32.xlu0 %v248, 2
        %v259 = vpop.permute.xlu0 %258
        %260 = vrot.lane.b32.xlu0 %v253, 2
        %v261 = vpop.permute.xlu0 %260
        %v264 = vadd.f32 %v170, %v259
        %v265 = vadd.f32 %v171, %v261
        %vm266 = vcmask 130064
        %267 = vst.msk [vmem:[#allocation2] sm:$0xff] %vm266, %v264
        %268 = vst.msk [vmem:[#allocation2 + $0x8] sm:$0xff] %vm266, %v265
        %v269 = vld [vmem:[%s165] sm:$0xff]
        %v270 = vld [vmem:[#allocation2] sm:$0xff]
        %v271 = vld [vmem:[#allocation2 + $0x8] sm:$0xff]
        %s272 = scalar_lea.vmem %s1, 16
        %v273 = vld [vmem:[%s272] sm:$0xff]
        %v274 = vld [vmem:[%s272 + $0x8] sm:$0xff]
        %v276 = vsel %vm174, %v273, 0
        %v279 = vsel %vm174, %v274, 0
        %281 = vmatprep.subr.mxu0 0.0
        %282 = vmatpush1.msra.mxu0 0.0
        %283 = vmatprep.subr.mxu0 0.0
        %284 = vmatpush1.msra.mxu0 0.0
        %285 = vmatprep.subr.mxu0 0.0
        %286 = vmatpush1.msra.mxu0 0.0
        %287 = vmatprep.subr.mxu0 0.0
        %288 = vmatpush1.msra.mxu0 0.0
        %289 = vmatprep.subr.mxu0 0.0
        %290 = vmatpush1.msra.mxu0 0.0
        %291 = vmatprep.subr.mxu0 0.0
        %292 = vmatpush1.msra.mxu0 0.0
        %293 = vmatprep.subr.mxu0 0.0
        %294 = vmatpush1.msra.mxu0 0.0
        %295 = vmatprep.subr.mxu0 0.0
        %296 = vmatpush1.msra.mxu0 0.0
        %297 = vmatprep.subr.mxu0 0.0
        %298 = vmatpush1.msra.mxu0 0.0
        %299 = vmatprep.subr.mxu0 0.0
        %300 = vmatpush1.msra.mxu0 0.0
        %301 = vmatprep.subr.mxu0 0.0
        %302 = vmatpush1.msra.mxu0 0.0
        %303 = vmatprep.subr.mxu0 0.0
        %304 = vmatpush1.msra.mxu0 0.0
        %305 = vmatprep.subr.mxu0 0.0
        %306 = vmatpush1.msra.mxu0 0.0
        %307 = vmatprep.subr.mxu0 0.0
        %308 = vmatpush1.msra.mxu0 0.0
        %309 = vmatprep.subr.mxu0 0.0
        %310 = vmatpush1.msra.mxu0 0.0
        %311 = vmatprep.subr.mxu0 0.0
        %312 = vmatpush1.msra.mxu0 %v269
        %313 = vmatprep.subr.mxu0 0.0
        %314 = vmatpush2.msra.mxu0 0.0
        %315 = vmatprep.subr.mxu0 0.0
        %316 = vmatpush2.msra.mxu0 0.0
        %317 = vmatprep.subr.mxu0 0.0
        %318 = vmatpush2.msra.mxu0 0.0
        %319 = vmatprep.subr.mxu0 0.0
        %320 = vmatpush2.msra.mxu0 0.0
        %321 = vmatprep.subr.mxu0 0.0
        %322 = vmatpush2.msra.mxu0 0.0
        %323 = vmatprep.subr.mxu0 0.0
        %324 = vmatpush2.msra.mxu0 0.0
        %325 = vmatprep.subr.mxu0 0.0
        %326 = vmatpush2.msra.mxu0 0.0
        %327 = vmatprep.subr.mxu0 0.0
        %328 = vmatpush2.msra.mxu0 0.0
        %329 = vmatprep.subr.mxu0 0.0
        %330 = vmatpush2.msra.mxu0 0.0
        %331 = vmatprep.subr.mxu0 0.0
        %332 = vmatpush2.msra.mxu0 0.0
        %333 = vmatprep.subr.mxu0 0.0
        %334 = vmatpush2.msra.mxu0 0.0
        %335 = vmatprep.subr.mxu0 0.0
        %336 = vmatpush2.msra.mxu0 0.0
        %337 = vmatprep.subr.mxu0 0.0
        %338 = vmatpush2.msra.mxu0 0.0
        %339 = vmatprep.subr.mxu0 0.0
        %340 = vmatpush2.msra.mxu0 0.0
        %341 = vmatprep.subr.mxu0 0.0
        %342 = vmatpush2.msra.mxu0 0.0
        %343 = vmatprep.subr.mxu0 0.0
        %344 = vmatpush2.msra.mxu0 0.0
        %345 = vmatprep.mubr.f32.mxu0 0.0
        %346 = vmatmul.mubr.f32.gmra.mxu0 %v276
        %v347 = vpop.f32.mrf.mxu0
        %v348 = vadd.f32 0.0, %v347
        %v349 = vpop.f32.mrf.mxu0
        %350 = vmatprep.mubr.f32.mxu0 0.0
        %351 = vmatmul.mubr.f32.gmra.mxu0 %v279
        %v352 = vpop.f32.mrf.mxu0
        %v353 = vadd.f32 0.0, %v352
        %v354 = vpop.f32.mrf.mxu0
        %355 = vdwg.mxu0
        %v356 = vadd.f32 %v270, %v348
        %v357 = vadd.f32 %v271, %v353
        %358 = vst.msk [vmem:[#allocation2] sm:$0xff] %vm166, %v356
        %359 = vst.msk [vmem:[#allocation2 + $0x8] sm:$0xff] %vm166, %v357
        %v360 = vld [vmem:[%s165] sm:$0xff]
        %v361 = vld [vmem:[#allocation2] sm:$0xff]
        %v362 = vld [vmem:[#allocation2 + $0x8] sm:$0xff]
        %s363 = scalar_lea.vmem %s1, 32
        %v364 = vld [vmem:[%s363] sm:$0xff]
        %v365 = vld [vmem:[%s363 + $0x8] sm:$0xff]
        %367 = vrot.lane.b32.xlu0 %v360, 126
        %v368 = vpop.permute.xlu0 %367
        %v371 = vsel %vm174, %v364, 0
        %v374 = vsel %vm174, %v365, 0
        %376 = vmatprep.subr.mxu0 0.0
        %377 = vmatpush1.msra.mxu0 0.0
        %378 = vmatprep.subr.mxu0 0.0
        %379 = vmatpush1.msra.mxu0 0.0
        %380 = vmatprep.subr.mxu0 0.0
        %381 = vmatpush1.msra.mxu0 0.0
        %382 = vmatprep.subr.mxu0 0.0
        %383 = vmatpush1.msra.mxu0 0.0
        %384 = vmatprep.subr.mxu0 0.0
        %385 = vmatpush1.msra.mxu0 0.0
        %386 = vmatprep.subr.mxu0 0.0
        %387 = vmatpush1.msra.mxu0 0.0
        %388 = vmatprep.subr.mxu0 0.0
        %389 = vmatpush1.msra.mxu0 0.0
        %390 = vmatprep.subr.mxu0 0.0
        %391 = vmatpush1.msra.mxu0 0.0
        %392 = vmatprep.subr.mxu0 0.0
        %393 = vmatpush1.msra.mxu0 0.0
        %394 = vmatprep.subr.mxu0 0.0
        %395 = vmatpush1.msra.mxu0 0.0
        %396 = vmatprep.subr.mxu0 0.0
        %397 = vmatpush1.msra.mxu0 0.0
        %398 = vmatprep.subr.mxu0 0.0
        %399 = vmatpush1.msra.mxu0 0.0
        %400 = vmatprep.subr.mxu0 0.0
        %401 = vmatpush1.msra.mxu0 0.0
        %402 = vmatprep.subr.mxu0 0.0
        %403 = vmatpush1.msra.mxu0 0.0
        %404 = vmatprep.subr.mxu0 0.0
        %405 = vmatpush1.msra.mxu0 0.0
        %406 = vmatprep.subr.mxu0 0.0
        %407 = vmatpush1.msra.mxu0 %v368
        %408 = vmatprep.subr.mxu0 0.0
        %409 = vmatpush2.msra.mxu0 0.0
        %410 = vmatprep.subr.mxu0 0.0
        %411 = vmatpush2.msra.mxu0 0.0
        %412 = vmatprep.subr.mxu0 0.0
        %413 = vmatpush2.msra.mxu0 0.0
        %414 = vmatprep.subr.mxu0 0.0
        %415 = vmatpush2.msra.mxu0 0.0
        %416 = vmatprep.subr.mxu0 0.0
        %417 = vmatpush2.msra.mxu0 0.0
        %418 = vmatprep.subr.mxu0 0.0
        %419 = vmatpush2.msra.mxu0 0.0
        %420 = vmatprep.subr.mxu0 0.0
        %421 = vmatpush2.msra.mxu0 0.0
        %422 = vmatprep.subr.mxu0 0.0
        %423 = vmatpush2.msra.mxu0 0.0
        %424 = vmatprep.subr.mxu0 0.0
        %425 = vmatpush2.msra.mxu0 0.0
        %426 = vmatprep.subr.mxu0 0.0
        %427 = vmatpush2.msra.mxu0 0.0
        %428 = vmatprep.subr.mxu0 0.0
        %429 = vmatpush2.msra.mxu0 0.0
        %430 = vmatprep.subr.mxu0 0.0
        %431 = vmatpush2.msra.mxu0 0.0
        %432 = vmatprep.subr.mxu0 0.0
        %433 = vmatpush2.msra.mxu0 0.0
        %434 = vmatprep.subr.mxu0 0.0
        %435 = vmatpush2.msra.mxu0 0.0
        %436 = vmatprep.subr.mxu0 0.0
        %437 = vmatpush2.msra.mxu0 0.0
        %438 = vmatprep.subr.mxu0 0.0
        %439 = vmatpush2.msra.mxu0 0.0
        %440 = vmatprep.mubr.f32.mxu0 0.0
        %441 = vmatmul.mubr.f32.gmra.mxu0 %v371
        %v442 = vpop.f32.mrf.mxu0
        %v443 = vadd.f32 0.0, %v442
        %v444 = vpop.f32.mrf.mxu0
        %445 = vmatprep.mubr.f32.mxu0 0.0
        %446 = vmatmul.mubr.f32.gmra.mxu0 %v374
        %v447 = vpop.f32.mrf.mxu0
        %v448 = vadd.f32 0.0, %v447
        %v449 = vpop.f32.mrf.mxu0
        %450 = vdwg.mxu0
        %v451 = vadd.f32 %v361, %v443
        %v452 = vadd.f32 %v362, %v448
        %vm453 = vcmask 113664
        %454 = vst.msk [vmem:[#allocation2] sm:$0xff] %vm453, %v451
        %455 = vst.msk [vmem:[#allocation2 + $0x8] sm:$0xff] %vm453, %v452
        %v456 = vld [vmem:[#allocation2] sm:$0xff]
        %v457 = vld [vmem:[#allocation2 + $0x8] sm:$0xff]
        %v458 = vld [vmem:[%s2] sm:$0xff]
        %v459 = vld [vmem:[%s2 + $0x8] sm:$0xff]
        %461 = vset.pattern.permute.xlu0 0
        %462 = vperm.xlu0 %461, %v458
        %v463 = vpop.permute.xlu0 %462
        %466 = vset.pattern.permute.xlu0 0
        %467 = vperm.xlu0 %466, %v459
        %v468 = vpop.permute.xlu0 %467
        %v470 = vadd.f32 %v456, %v463
        %v471 = vadd.f32 %v457, %v468
        %472 = vst.msk [vmem:[%s161] sm:$0xff] %vm166, %v470
        %473 = vst.msk [vmem:[%s161 + $0x8] sm:$0xff] %vm166, %v471
        %s474 = sand.u32 %s93, 1
        %s475 = scalar_lea.sflag [#allocation4], %s474
        %s476 = sand.u32 %s93, 1
        %s477 = smul.addr %s476, 16
        %s478 = scalar_lea.vmem [#allocation3], %s477
        // Predicated region
        $region33: #{tpu_custom_call.1} parent=31 // pred_check
          %p479 = pneg %p103
        $region34: #{tpu_custom_call.1} parent=31 // pred_check_branch
          %481 = sbr.rel (%p479) target = $region36
        $region35: #{tpu_custom_call.1} parent=31 // pred_region
          %s483 = ssub.s32 256, 256
          %484 = vsyncadd %s475, %s483
          %s485 = smul.addr %s17, 2
          %s486 = smul.addr %s485, 128
          %s487 = scalar_lea.hbm %s3, %s486
          %s488 = sshll.u32 %s478, 4
          %s489 = int_to_ptr.vmem [resolvable:$true] %s488
          %494 = dma.vmem_to_hbm [thread:$0]  %s489, 256, %s487, %s475, 128, 128, 8
        $region36: #{tpu_custom_call.1} parent=31 // pred_fallthru
          _
      $region32: #{tpu_custom_call.1} parent=5 // pred_fallthru
        _
      %p495 = scmp.le.s32.totalorder 2, %s12
      // Predicated region
      $region37: #{tpu_custom_call.1} parent=5 // pred_check
        %p496 = pneg %p495
      $region38: #{tpu_custom_call.1} parent=5 // pred_check_branch
        %498 = sbr.rel (%p496) target = $region40
      $region39: #{tpu_custom_call.1} parent=5 // pred_region
        %s499 = ssub.s32 %s12, 2
        // Predicated region
        $region41: #{tpu_custom_call.1} parent=39 // pred_check
          %p500 = pneg %p109
        $region42: #{tpu_custom_call.1} parent=39 // pred_check_branch
          %502 = sbr.rel (%p500) target = $region44
        $region43: #{tpu_custom_call.1} parent=39 // pred_region
          %s503 = sand.u32 %s94, 1
          %s504 = scalar_lea.sflag [#allocation4], %s503
          %s505 = sand.u32 %s94, 1
          %s506 = smul.addr %s505, 16
          %s507 = scalar_lea.vmem [#allocation3], %s506
          %508 = dma.done %s504, 256
        $region44: #{tpu_custom_call.1} parent=39 // pred_fallthru
          _
      $region40: #{tpu_custom_call.1} parent=5 // pred_fallthru
        _
    $region6: #{tpu_custom_call.1} parent=1 // loop_footer
      %s16 = sadd.s32 1, %s12
    $region7: #{tpu_custom_call.1} parent=1 // loop_footer_branch
      %11 = sbr.rel target = $region3
    $region8: #{tpu_custom_call.1} parent=1 // loop_exit
      _
    %509 = vsyncpa [#allocation4], 1
    %s510 = scalar_lea.sflag [#allocation4], 1
    %511 = vsyncpa %s510, 1

</llo_original>
